<compile_context>
chip_gen: v5e
topology: v5e:2x2
jax: 0.10.0
libtpu: 0.0.40
codegen_flags: <defaults>
</compile_context>

<pallas_src>
import functools

import jax
import jax.numpy as jnp
from jax.experimental import pallas as pl
from jax.experimental.pallas import tpu as pltpu


# Landmark index ranges (start, stop) for the two normalization modes, taken
# straight from NRMSELoss.eye_dist.
EYE_DIST_SLICES = {
    "outer_eyes_distance": ((36, 37), (45, 46)),
    "pupil_distance": ((36, 42), (42, 48)),
}

_MAX_TILE_B = 512  # rows per grid step for large batches (~0.5 MiB/input tile)


def make_nrmse_loss(norm="pupil_distance", weight=1.0, eps=1e-9, tile_b=None):
    """Returns fn(input, target) -> scalar NRMSE loss (matches NRMSELoss.forward).

    `tile_b` optionally overrides the batch-tile size (mostly for testing the
    multi-tile / masked-tail path at small shapes).
    """
    if norm not in EYE_DIST_SLICES:
        raise ValueError(f"norm {norm} not allowed")
    (l0, l1), (r0, r1) = EYE_DIST_SLICES[norm]
    # NOTE: `eps` is stored but never used in the PyTorch forward; same here.

    def kernel(ix_ref, iy_ref, tx_ref, ty_ref, out_ref, *, n_landmarks, batch, tb):
        i = pl.program_id(0)

        ix = ix_ref[...].astype(jnp.float32)  # (TB, N)
        iy = iy_ref[...].astype(jnp.float32)
        tx = tx_ref[...].astype(jnp.float32)
        ty = ty_ref[...].astype(jnp.float32)

        # Per-point L2 distance: pure VPU adds/muls + EUP sqrt (no cross-lane
        # reduce over a degenerate coord axis).
        dx = tx - ix
        dy = ty - iy
        dist = jnp.sqrt(dx * dx + dy * dy)                       # (TB, N)

        # Sum over landmarks (cross-lane reduce over 68 real lanes).
        sum_dist = jnp.sum(dist, axis=-1, keepdims=True)         # (TB, 1)

        # Inter-ocular distance from the *target* landmarks.
        lx = jnp.mean(tx[:, l0:l1], axis=-1, keepdims=True)      # (TB, 1)
        ly = jnp.mean(ty[:, l0:l1], axis=-1, keepdims=True)
        rx = jnp.mean(tx[:, r0:r1], axis=-1, keepdims=True)
        ry = jnp.mean(ty[:, r0:r1], axis=-1, keepdims=True)
        ddx = lx - rx
        ddy = ly - ry
        dio = jnp.sqrt(ddx * ddx + ddy * ddy)                    # (TB, 1)

        # Mask rows that fall past the real batch (partial last tile).
        row = jax.lax.broadcasted_iota(jnp.int32, (tb, 1), 0) + i * tb
        valid = row < batch
        safe_dio = jnp.where(valid, dio, 1.0)

        # Landmark mean folded into a single scale; weight/B applied in wrapper.
        mean_dist = sum_dist * jnp.float32(1.0 / n_landmarks)
        ratio = jnp.where(valid, mean_dist / safe_dio, 0.0)      # (TB, 1)

        # Per-tile partial sum of (mean_dist / dio).
        out_ref[...] = jnp.reshape(jnp.sum(ratio), (1, 1))

    def loss_fn(inp, tgt):
        assert inp.shape == tgt.shape and inp.ndim == 3
        B, N, D = inp.shape
        assert D == 2 and N > max(l1, r1) - 1, "expects (B, N>=48, 2) landmarks"

        # Lane-dense layout plumbing (done once in the wrapper, outside the
        # kernel): landmarks -> lanes, coords -> separate arrays.
        ix, iy = inp[..., 0], inp[..., 1]                        # (B, N) each
        tx, ty = tgt[..., 0], tgt[..., 1]

        tb = tile_b if tile_b is not None else min(B, _MAX_TILE_B)
        num_tiles = (B + tb - 1) // tb

        in_spec = pl.BlockSpec((tb, N), lambda i: (i, 0))
        partials = pl.pallas_call(
            functools.partial(kernel, n_landmarks=N, batch=B, tb=tb),
            out_shape=jax.ShapeDtypeStruct((num_tiles, 1), jnp.float32),
            grid=(num_tiles,),
            in_specs=[in_spec, in_spec, in_spec, in_spec],
            out_specs=pl.BlockSpec((1, 1), lambda i: (i, 0)),
            compiler_params=pltpu.CompilerParams(
                dimension_semantics=("parallel",)
            ),
        )(ix, iy, tx, ty)

        # Finalize: batch mean and weight folded into one scalar scale.
        return (weight / B) * jnp.sum(partials)

    return loss_fn


def nrmse_reference(inp, tgt, norm="pupil_distance", weight=1.0):
    """Pure-JAX reference mirroring the PyTorch forward, for verification."""
    (l0, l1), (r0, r1) = EYE_DIST_SLICES[norm]
    dist = jnp.linalg.norm(tgt - inp, axis=-1)                   # (B, N)
    left = jnp.mean(tgt[:, l0:l1, :], axis=1)
    right = jnp.mean(tgt[:, r0:r1, :], axis=1)
    dio = jnp.linalg.norm(left - right, axis=-1)                 # (B,)
    return weight * jnp.mean(jnp.mean(dist, axis=-1) / dio)


if __name__ == "__main__":
    key = jax.random.PRNGKey(0)
    k1, k2, k3, k4 = jax.random.split(key, 4)

    N, D = 68, 2  # 68 facial landmarks, (x, y) coords — required by index sets

    # Case 1: tiny batch (as in the original module usage), single tile.
    B1 = 2
    target1 = jax.random.uniform(k1, (B1, N, D), dtype=jnp.float32) * 64.0
    pred1 = target1 + 0.5 * jax.random.normal(k2, (B1, N, D), dtype=jnp.float32)
    loss_fn1 = make_nrmse_loss(norm="pupil_distance", weight=1.0)
    loss1 = jax.block_until_ready(loss_fn1(pred1, target1))
    ref1 = jax.block_until_ready(nrmse_reference(pred1, target1))
    assert jnp.isfinite(loss1), "kernel produced non-finite loss"
    assert jnp.allclose(loss1, ref1, rtol=1e-5, atol=1e-6), (loss1, ref1)

    # Case 2: multi-tile grid with a masked partial last tile (B=20, TB=8).
    B2 = 20
    target2 = jax.random.uniform(k3, (B2, N, D), dtype=jnp.float32) * 64.0
    pred2 = target2 + 0.5 * jax.random.normal(k4, (B2, N, D), dtype=jnp.float32)
    loss_fn2 = make_nrmse_loss(norm="outer_eyes_distance", weight=2.0, tile_b=8)
    loss2 = jax.block_until_ready(loss_fn2(pred2, target2))
    ref2 = jax.block_until_ready(
        nrmse_reference(pred2, target2, norm="outer_eyes_distance", weight=2.0))
    assert jnp.isfinite(loss2), "kernel produced non-finite loss"
    assert jnp.allclose(loss2, ref2, rtol=1e-5, atol=1e-6), (loss2, ref2)

    print("KERNEL_OK")
</pallas_src>

<mosaic_0001>
module attributes {stable_mosaic.version = 11 : i64} {
  func.func @kernel(%arg0: i32, %arg1: memref<2x68xf32, #tpu.memory_space<vmem>>, %arg2: memref<2x68xf32, #tpu.memory_space<vmem>>, %arg3: memref<2x68xf32, #tpu.memory_space<vmem>>, %arg4: memref<2x68xf32, #tpu.memory_space<vmem>>, %arg5: memref<1x1xf32, #tpu.memory_space<vmem>>) attributes {dimension_semantics = [#tpu.dimension_semantics<parallel>], iteration_bounds = array<i64: 1>, scalar_prefetch = 0 : i64, scratch_operands = 0 : i64, tpu.core_type = #tpu.core_type<tc>, window_params = [{transform_indices = @transform_0, window_bounds = array<i64: 2, 68>}, {transform_indices = @transform_1, window_bounds = array<i64: 2, 68>}, {transform_indices = @transform_2, window_bounds = array<i64: 2, 68>}, {transform_indices = @transform_3, window_bounds = array<i64: 2, 68>}, {transform_indices = @transform_4, window_bounds = array<i64: 1, 1>}]} {
    %c0 = arith.constant 0 : index
    %c0_0 = arith.constant 0 : index
    %0 = vector.load %arg1[%c0, %c0_0] : memref<2x68xf32, #tpu.memory_space<vmem>>, vector<2x68xf32>
    %c0_1 = arith.constant 0 : index
    %c0_2 = arith.constant 0 : index
    %1 = vector.load %arg2[%c0_1, %c0_2] : memref<2x68xf32, #tpu.memory_space<vmem>>, vector<2x68xf32>
    %c0_3 = arith.constant 0 : index
    %c0_4 = arith.constant 0 : index
    %2 = vector.load %arg3[%c0_3, %c0_4] : memref<2x68xf32, #tpu.memory_space<vmem>>, vector<2x68xf32>
    %c0_5 = arith.constant 0 : index
    %c0_6 = arith.constant 0 : index
    %3 = vector.load %arg4[%c0_5, %c0_6] : memref<2x68xf32, #tpu.memory_space<vmem>>, vector<2x68xf32>
    %4 = arith.subf %2, %0 : vector<2x68xf32>
    %5 = arith.subf %3, %1 : vector<2x68xf32>
    %6 = arith.mulf %4, %4 : vector<2x68xf32>
    %7 = arith.mulf %5, %5 : vector<2x68xf32>
    %8 = arith.addf %6, %7 : vector<2x68xf32>
    %9 = math.sqrt %8 : vector<2x68xf32>
    %cst = arith.constant dense<0.000000e+00> : vector<2xf32>
    %10 = vector.multi_reduction <add>, %9, %cst [1] : vector<2x68xf32> to vector<2xf32>
    %11 = vector.shape_cast %10 : vector<2xf32> to vector<2x1xf32>
    %12 = vector.extract_strided_slice %2 {offsets = [0, 36], sizes = [2, 6], strides = [1, 1]} : vector<2x68xf32> to vector<2x6xf32>
    %cst_7 = arith.constant dense<0.000000e+00> : vector<2xf32>
    %13 = vector.multi_reduction <add>, %12, %cst_7 [1] : vector<2x6xf32> to vector<2xf32>
    %14 = vector.shape_cast %13 : vector<2xf32> to vector<2x1xf32>
    %cst_8 = arith.constant 6.000000e+00 : f32
    %15 = vector.broadcast %cst_8 : f32 to vector<2x1xf32>
    %16 = arith.divf %14, %15 : vector<2x1xf32>
    %17 = vector.extract_strided_slice %3 {offsets = [0, 36], sizes = [2, 6], strides = [1, 1]} : vector<2x68xf32> to vector<2x6xf32>
    %cst_9 = arith.constant dense<0.000000e+00> : vector<2xf32>
    %18 = vector.multi_reduction <add>, %17, %cst_9 [1] : vector<2x6xf32> to vector<2xf32>
    %19 = vector.shape_cast %18 : vector<2xf32> to vector<2x1xf32>
    %cst_10 = arith.constant 6.000000e+00 : f32
    %20 = vector.broadcast %cst_10 : f32 to vector<2x1xf32>
    %21 = arith.divf %19, %20 : vector<2x1xf32>
    %22 = vector.extract_strided_slice %2 {offsets = [0, 42], sizes = [2, 6], strides = [1, 1]} : vector<2x68xf32> to vector<2x6xf32>
    %cst_11 = arith.constant dense<0.000000e+00> : vector<2xf32>
    %23 = vector.multi_reduction <add>, %22, %cst_11 [1] : vector<2x6xf32> to vector<2xf32>
    %24 = vector.shape_cast %23 : vector<2xf32> to vector<2x1xf32>
    %cst_12 = arith.constant 6.000000e+00 : f32
    %25 = vector.broadcast %cst_12 : f32 to vector<2x1xf32>
    %26 = arith.divf %24, %25 : vector<2x1xf32>
    %27 = vector.extract_strided_slice %3 {offsets = [0, 42], sizes = [2, 6], strides = [1, 1]} : vector<2x68xf32> to vector<2x6xf32>
    %cst_13 = arith.constant dense<0.000000e+00> : vector<2xf32>
    %28 = vector.multi_reduction <add>, %27, %cst_13 [1] : vector<2x6xf32> to vector<2xf32>
    %29 = vector.shape_cast %28 : vector<2xf32> to vector<2x1xf32>
    %cst_14 = arith.constant 6.000000e+00 : f32
    %30 = vector.broadcast %cst_14 : f32 to vector<2x1xf32>
    %31 = arith.divf %29, %30 : vector<2x1xf32>
    %32 = arith.subf %16, %26 : vector<2x1xf32>
    %33 = arith.subf %21, %31 : vector<2x1xf32>
    %34 = arith.mulf %32, %32 : vector<2x1xf32>
    %35 = arith.mulf %33, %33 : vector<2x1xf32>
    %36 = arith.addf %34, %35 : vector<2x1xf32>
    %37 = math.sqrt %36 : vector<2x1xf32>
    %38 = tpu.iota {dimensions = array<i32: 0>} : vector<2x1xi32>
    %c2_i32 = arith.constant 2 : i32
    %39 = arith.muli %arg0, %c2_i32 : i32
    %40 = vector.broadcast %39 : i32 to vector<2x1xi32>
    %41 = arith.addi %38, %40 : vector<2x1xi32>
    %c2_i32_15 = arith.constant 2 : i32
    %42 = vector.broadcast %c2_i32_15 : i32 to vector<2x1xi32>
    %43 = arith.cmpi slt, %41, %42 : vector<2x1xi32>
    %cst_16 = arith.constant 1.000000e+00 : f32
    %44 = vector.broadcast %cst_16 : f32 to vector<2x1xf32>
    %45 = arith.select %43, %37, %44 : vector<2x1xi1>, vector<2x1xf32>
    %cst_17 = arith.constant 0.0147058824 : f32
    %46 = vector.broadcast %cst_17 : f32 to vector<2x1xf32>
    %47 = arith.mulf %11, %46 : vector<2x1xf32>
    %48 = arith.divf %47, %45 : vector<2x1xf32>
    %cst_18 = arith.constant 0.000000e+00 : f32
    %49 = vector.broadcast %cst_18 : f32 to vector<2x1xf32>
    %50 = arith.select %43, %48, %49 : vector<2x1xi1>, vector<2x1xf32>
    %51 = vector.shape_cast %50 : vector<2x1xf32> to vector<1x2x1xf32>
    %cst_19 = arith.constant dense<0.000000e+00> : vector<1xf32>
    %52 = vector.multi_reduction <add>, %51, %cst_19 [1, 2] : vector<1x2x1xf32> to vector<1xf32>
    %53 = vector.shape_cast %52 : vector<1xf32> to vector<1x1x1xf32>
    %54 = vector.extract %53[0, 0, 0] : f32 from vector<1x1x1xf32>
    %55 = vector.broadcast %54 : f32 to vector<1x1xf32>
    %c0_20 = arith.constant 0 : index
    %c0_21 = arith.constant 0 : index
    %56 = vector.load %arg5[%c0_20, %c0_21] : memref<1x1xf32, #tpu.memory_space<vmem>>, vector<1x1xf32>
    tpu.vector_store %arg5[%c0_20, %c0_21], %55 {strides = array<i32>} : memref<1x1xf32, #tpu.memory_space<vmem>>, vector<1x1xf32>,
    return
  }
  func.func @transform_0(%arg0: i32) -> (i32, i32) {
    %c0_i32 = arith.constant 0 : i32
    %c0_i32_0 = arith.constant 0 : i32
    return %arg0, %c0_i32 : i32, i32
  }
  func.func @transform_1(%arg0: i32) -> (i32, i32) {
    %c0_i32 = arith.constant 0 : i32
    %c0_i32_0 = arith.constant 0 : i32
    return %arg0, %c0_i32 : i32, i32
  }
  func.func @transform_2(%arg0: i32) -> (i32, i32) {
    %c0_i32 = arith.constant 0 : i32
    %c0_i32_0 = arith.constant 0 : i32
    return %arg0, %c0_i32 : i32, i32
  }
  func.func @transform_3(%arg0: i32) -> (i32, i32) {
    %c0_i32 = arith.constant 0 : i32
    %c0_i32_0 = arith.constant 0 : i32
    return %arg0, %c0_i32 : i32, i32
  }
  func.func @transform_4(%arg0: i32) -> (i32, i32) {
    %c0_i32 = arith.constant 0 : i32
    %c0_i32_0 = arith.constant 0 : i32
    return %arg0, %c0_i32 : i32, i32
  }
}

</mosaic_0001>

<llo_original>
// kernel: tpu_custom_call.1
$region0: #{tpu_custom_call.1}
  #allocation0 [shape = 'u32[]', space=smem, size = 0x4, offset = 0x4, fixed_abs, tag = 'smem constant byte address 0x4 - core index']
  #allocation1 [shape = 'u32[72,128]{1,0:T(1,128)}', space=vmem, size = 0x9000, scoped, tag = 'internal scratch']
  %s0 = inlined_call_operand.hbm [shape: f32[2,68], index: 0, kind: input, shape index: {}]
  %s1 = inlined_call_operand.hbm [shape: f32[2,68], index: 1, kind: input, shape index: {}]
  %s2 = inlined_call_operand.hbm [shape: f32[2,68], index: 2, kind: input, shape index: {}]
  %s3 = inlined_call_operand.vmem [shape: f32[2,68], index: 3, kind: input, shape index: {}]
  %s4 = inlined_call_operand.hbm [shape: f32[1,1], index: 4, kind: output, shape index: {}]
  %s5 = sld [smem:[#allocation0]]
  $region38: #{tpu_custom_call.1} parent=0
    _
  %s7 = ssub.s32 1, %s5
  %s8 = scalar_select 0, %s7, %s5
  $region1: #{tpu_custom_call.1} parent=0
    #allocation2 [shape = 'u8[1024]{0}', space=vmem, size = 0x400, scoped, tag = 'input window, operand 0, single buffered']
    #allocation3 [shape = 's32[1]{0}', space=sflag, size = 0x4, scoped, tag = 'scoped memory for tpu_custom_call.1']
    #allocation4 [shape = 's32[1]{0}', space=sflag, size = 0x4, scoped, tag = 'scoped memory for tpu_custom_call.1']
    #allocation5 [shape = 'u8[1024]{0}', space=vmem, size = 0x400, scoped, tag = 'input window, operand 1, single buffered']
    #allocation6 [shape = 's32[1]{0}', space=sflag, size = 0x4, scoped, tag = 'scoped memory for tpu_custom_call.1']
    #allocation7 [shape = 'u8[1024]{0}', space=vmem, size = 0x400, scoped, tag = 'input window, operand 2, single buffered']
    #allocation8 [shape = 'u8[512]{0}', space=vmem, size = 0x400, scoped, tag = 'output window, operand 0, single buffered']
    %9 = vsyncpa [#allocation3], 0
    %10 = vsyncpa [#allocation6], 0
    %11 = vsyncpa [#allocation4], 0
    // Predicated region
    $region2: #{tpu_custom_call.1} parent=1 // pred_check
      _
    $region3: #{tpu_custom_call.1} parent=1 // pred_check_branch
      %13 = sbr.rel (0) target = $region5
    $region4: #{tpu_custom_call.1} parent=1 // pred_region
      %15 = vsyncadd [#allocation3], 0
      %s17 = sshll.u32 %s0, 4
      %s18 = int_to_ptr.hbm [resolvable:$true] %s17
      %s19 = sshll.u32 [#allocation2], 4
      %s20 = int_to_ptr.vmem [resolvable:$true] %s19
      %22 = dma.hbm_to_vmem [thread:$0]  %s18, 32, %s20, [#allocation3]
    $region5: #{tpu_custom_call.1} parent=1 // pred_fallthru
      _
    // Predicated region
    $region6: #{tpu_custom_call.1} parent=1 // pred_check
      _
    $region7: #{tpu_custom_call.1} parent=1 // pred_check_branch
      %24 = sbr.rel (0) target = $region9
    $region8: #{tpu_custom_call.1} parent=1 // pred_region
      %26 = vsyncadd [#allocation6], 0
      %s28 = sshll.u32 %s1, 4
      %s29 = int_to_ptr.hbm [resolvable:$true] %s28
      %s30 = sshll.u32 [#allocation5], 4
      %s31 = int_to_ptr.vmem [resolvable:$true] %s30
      %33 = dma.hbm_to_vmem [thread:$0]  %s29, 32, %s31, [#allocation6]
    $region9: #{tpu_custom_call.1} parent=1 // pred_fallthru
      _
    // Predicated region
    $region10: #{tpu_custom_call.1} parent=1 // pred_check
      _
    $region11: #{tpu_custom_call.1} parent=1 // pred_check_branch
      %35 = sbr.rel (0) target = $region13
    $region12: #{tpu_custom_call.1} parent=1 // pred_region
      %37 = vsyncadd [#allocation6], 0
      %s39 = sshll.u32 %s2, 4
      %s40 = int_to_ptr.hbm [resolvable:$true] %s39
      %s41 = sshll.u32 [#allocation7], 4
      %s42 = int_to_ptr.vmem [resolvable:$true] %s41
      %44 = dma.hbm_to_vmem [thread:$0]  %s40, 32, %s42, [#allocation6]
    $region13: #{tpu_custom_call.1} parent=1 // pred_fallthru
      _
    // Predicated region
    $region14: #{tpu_custom_call.1} parent=1 // pred_check
      _
    $region15: #{tpu_custom_call.1} parent=1 // pred_check_branch
      %46 = sbr.rel (0) target = $region17
    $region16: #{tpu_custom_call.1} parent=1 // pred_region
      _
    $region17: #{tpu_custom_call.1} parent=1 // pred_fallthru
      _
    // Predicated region
    $region18: #{tpu_custom_call.1} parent=1 // pred_check
      _
    $region19: #{tpu_custom_call.1} parent=1 // pred_check_branch
      %48 = sbr.rel (0) target = $region21
    $region20: #{tpu_custom_call.1} parent=1 // pred_region
      %50 = dma.done [#allocation3], 32
    $region21: #{tpu_custom_call.1} parent=1 // pred_fallthru
      _
    // Predicated region
    $region22: #{tpu_custom_call.1} parent=1 // pred_check
      _
    $region23: #{tpu_custom_call.1} parent=1 // pred_check_branch
      %52 = sbr.rel (0) target = $region25
    $region24: #{tpu_custom_call.1} parent=1 // pred_region
      %54 = dma.done [#allocation6], 32
    $region25: #{tpu_custom_call.1} parent=1 // pred_fallthru
      _
    // Predicated region
    $region26: #{tpu_custom_call.1} parent=1 // pred_check
      _
    $region27: #{tpu_custom_call.1} parent=1 // pred_check_branch
      %56 = sbr.rel (0) target = $region29
    $region28: #{tpu_custom_call.1} parent=1 // pred_region
      %58 = dma.done [#allocation6], 32
    $region29: #{tpu_custom_call.1} parent=1 // pred_fallthru
      _
    %v59 = vld [vmem:[#allocation2] sm:$0x3]
    %v60 = vld [vmem:[#allocation5] sm:$0x3]
    %v61 = vld [vmem:[#allocation7] sm:$0x3]
    %v62 = vld [vmem:[%s3] sm:$0x3]
    %v63 = vsub.f32 %v61, %v59
    %v64 = vsub.f32 %v62, %v60
    %v65 = vmul.f32 %v63, %v63
    %v66 = vmul.f32 %v64, %v64
    %v67 = vadd.f32 %v65, %v66
    %v68 = vrsqrt.pop %v67
    %v69 = vmul.f32 %v68, %v67
    %v70 = vmul.f32 %v69, %v68
    %v71 = vmul.f32 0.5, %v70
    %v72 = vsub.f32 1.5, %v71
    %v73 = vmul.f32 %v68, %v72
    %v74 = vmul.f32 %v67, %v73
    %vm75 = vcmp.eq.f32.partialorder %v67, inf
    %v76 = vsel %vm75, %v67, %v74
    %vm77 = vcmp.eq.f32.partialorder %v67, 0.0
    %v78 = vand.u32 %v67, 2147483648
    %v79 = vsel %vm77, %v78, %v76
    %vm80 = vcmask 549888
    %v81 = vsel %vm80, %v79, 0.0
    %82 = vadd.xlane.f32.xlu0 %v81
    %v83 = vpop.xlane.xlu0 %82
    %85 = vrot.lane.b32.xlu0 %v61, 92
    %v86 = vpop.permute.xlu0 %85
    %vm88 = vcmask 41984
    %v89 = vsel %vm88, %v86, 0.0
    %90 = vadd.xlane.f32.xlu0 %v89
    %v91 = vpop.xlane.xlu0 %90
    %v92 = vrcp.pop 6.0
    %v93 = vmul.f32 6.0, %v92
    %v94 = vsub.f32 1.0, %v93
    %v95 = vmul.f32 %v92, %v94
    %v96 = vadd.f32 %v92, %v95
    %vm97 = vweird.f32 %v92
    %v98 = vsel %vm97, %v92, %v96
    %v99 = vmul.f32 %v91, %v98
    %101 = vrot.lane.b32.xlu0 %v62, 92
    %v102 = vpop.permute.xlu0 %101
    %v104 = vsel %vm88, %v102, 0.0
    %105 = vadd.xlane.f32.xlu0 %v104
    %v106 = vpop.xlane.xlu0 %105
    %v107 = vmul.f32 %v106, %v98
    %108 = vrot.lane.b32.xlu0 %v61, 86
    %v109 = vpop.permute.xlu0 %108
    %v111 = vsel %vm88, %v109, 0.0
    %112 = vadd.xlane.f32.xlu0 %v111
    %v113 = vpop.xlane.xlu0 %112
    %v114 = vmul.f32 %v113, %v98
    %115 = vrot.lane.b32.xlu0 %v62, 86
    %v116 = vpop.permute.xlu0 %115
    %v118 = vsel %vm88, %v116, 0.0
    %119 = vadd.xlane.f32.xlu0 %v118
    %v120 = vpop.xlane.xlu0 %119
    %v121 = vmul.f32 %v120, %v98
    %v122 = vsub.f32 %v99, %v114
    %v123 = vsub.f32 %v107, %v121
    %v124 = vmul.f32 %v122, %v122
    %v125 = vmul.f32 %v123, %v123
    %v126 = vadd.f32 %v124, %v125
    %v127 = vrsqrt.pop %v126
    %v128 = vmul.f32 %v127, %v126
    %v129 = vmul.f32 %v128, %v127
    %v130 = vmul.f32 0.5, %v129
    %v131 = vsub.f32 1.5, %v130
    %v132 = vmul.f32 %v127, %v131
    %v133 = vmul.f32 %v126, %v132
    %vm134 = vcmp.eq.f32.partialorder %v126, inf
    %v135 = vsel %vm134, %v126, %v133
    %vm136 = vcmp.eq.f32.partialorder %v126, 0.0
    %v137 = vand.u32 %v126, 2147483648
    %v138 = vsel %vm136, %v137, %v135
    %v139 = vlaneseq
    %v140 = vshrl.u32 %v139, 7
    %s141 = smul.u32 0, 2
    %v142 = vstv %s141
    %v143 = vadd.s32 %v140, %v142
    %vm144 = vcmp.lt.s32.totalorder %v143, 2
    %v145 = vsel %vm144, %v138, 1.0
    %v146 = vmul.f32 %v83, 0.014705882
    %v147 = vrcp.pop %v145
    %v148 = vmul.f32 %v145, %v147
    %v149 = vsub.f32 1.0, %v148
    %v150 = vmul.f32 %v147, %v149
    %v151 = vadd.f32 %v147, %v150
    %vm152 = vweird.f32 %v145
    %vm153 = vweird.f32 %v147
    %vm154 = vmor %vm152, %vm153
    %v155 = vsel %vm154, %v147, %v151
    %v156 = vand.u32 2147483647, %v145
    %vm157 = vcmp.eq.f32.partialorder %v156, 8.507059e+37
    %v158 = vand.u32 %v145, 2147483648
    %v159 = vor.u32 1.1754944e-38, %v158
    %v160 = vsel %vm157, %v159, %v155
    %v161 = vmul.f32 %v146, %v160
    %v162 = vsel %vm144, %v161, 0.0
    %vm163 = vcmask 1024
    %v164 = vsel %vm163, %v162, 0.0
    %165 = vadd.xlane.f32.xlu0 %v164
    %v166 = vpop.xlane.xlu0 %165
    %v167 = vrot.slane %v166, 4
    %v168 = vadd.f32 %v166, %v167
    %v169 = vrot.slane %v168, 2
    %v170 = vadd.f32 %v168, %v169
    %v171 = vrot.slane %v170, 1
    %v172 = vadd.f32 %v170, %v171
    %s173 = vtos %v172
    %v174 = vstv %s173
    %vm175 = vcmask 0
    %176 = vst.msk [vmem:[#allocation8] sm:$0x1] %vm175, %v174
    // Predicated region
    $region30: #{tpu_custom_call.1} parent=1 // pred_check
      _
    $region31: #{tpu_custom_call.1} parent=1 // pred_check_branch
      %178 = sbr.rel (0) target = $region33
    $region32: #{tpu_custom_call.1} parent=1 // pred_region
      %180 = vsyncadd [#allocation4], 0
      %s182 = sshll.u32 [#allocation8], 4
      %s183 = int_to_ptr.vmem [resolvable:$true] %s182
      %s184 = sshll.u32 %s4, 4
      %s185 = int_to_ptr.hbm [resolvable:$true] %s184
      %187 = dma.vmem_to_hbm [thread:$0]  %s183, 16, %s185, [#allocation4]
    $region33: #{tpu_custom_call.1} parent=1 // pred_fallthru
      _
    // Predicated region
    $region34: #{tpu_custom_call.1} parent=1 // pred_check
      _
    $region35: #{tpu_custom_call.1} parent=1 // pred_check_branch
      %189 = sbr.rel (0) target = $region37
    $region36: #{tpu_custom_call.1} parent=1 // pred_region
      %191 = dma.done [#allocation4], 16
    $region37: #{tpu_custom_call.1} parent=1 // pred_fallthru
      _
    %192 = vsyncpa [#allocation3], 1
    %193 = vsyncpa [#allocation6], 1
    %194 = vsyncpa [#allocation4], 1

</llo_original>
